<compile_context>
chip_gen: v5e
topology: v5e:2x2
jax: 0.10.0
libtpu: 0.0.40
codegen_flags: <defaults>
</compile_context>

<pallas_src>
import math

import jax
import jax.numpy as jnp
from jax.experimental import pallas as pl
from jax.experimental.pallas import tpu as pltpu


def _cdiv(a: int, b: int) -> int:
    return -(-a // b)


def _expand_kernel(x_ref, o_ref):
    # Broadcast the (small) input block to the full output block shape in VMEM.
    o_ref[...] = jnp.broadcast_to(x_ref[...], o_ref.shape)


def _resolve_size(size, in_shape):
    """Resolve PyTorch expand() size: handle -1 entries and new leading dims."""
    size = [int(s) for s in size]
    ndim_out, ndim_in = len(size), len(in_shape)
    if ndim_out < ndim_in:
        raise ValueError("expand size must have at least input rank dims")
    offset = ndim_out - ndim_in
    out = []
    for d, s in enumerate(size):
        if s == -1:
            if d < offset:
                raise ValueError("-1 not allowed for new leading dims")
            out.append(int(in_shape[d - offset]))
        else:
            out.append(s)
    return tuple(out), offset


def _merge_dims(in_shape, out_shape):
    """Merge adjacent dims that share the same broadcast status."""
    in_m, out_m, bcast = [], [], []
    for i_d, o_d in zip(in_shape, out_shape):
        is_b = (i_d == 1 and o_d != 1)
        if in_m and bcast[-1] == is_b:
            in_m[-1] *= i_d
            out_m[-1] *= o_d
        else:
            in_m.append(int(i_d))
            out_m.append(int(o_d))
            bcast.append(is_b)
    return in_m, out_m, bcast


def _factor_scalar(n: int, lane_cap: int):
    """Factor n == rows * cols with cols a multiple of 128 (lane-dense stores).

    Prefers the largest such cols that still leaves rows >= 8 (sublane-dense).
    Falls back to (1, n) if n has no divisor that is a multiple of 128.
    """
    cands = []
    c = min(lane_cap, n)
    c -= c % 128
    while c >= 128:
        if n % c == 0:
            cands.append(c)
        c -= 128
    for c in cands:                      # descending cols
        if n // c >= 8:
            return n // c, c
    if cands:
        c = cands[0]
        return n // c, c
    return 1, n


def expand_pallas(x: jax.Array, size, *,
                  target_block_bytes: int = 4 * 1024 * 1024,
                  lane_cap: int = 2048) -> jax.Array:
    """Equivalent of `in_tensor.expand(*size)` as a Pallas TPU kernel."""
    out_shape, offset = _resolve_size(size, x.shape)
    in_aligned = (1,) * offset + tuple(int(d) for d in x.shape)

    for i_d, o_d in zip(in_aligned, out_shape):
        if i_d != o_d and i_d != 1:
            raise ValueError(f"cannot expand dim of size {i_d} to {o_d}")

    # Degenerate cases: empty output / input.
    if any(d == 0 for d in out_shape) or x.size == 0:
        return jnp.broadcast_to(x.reshape(in_aligned), out_shape)
    # Pure view-style expand (no actual broadcasting): no data movement needed.
    if tuple(out_shape) == in_aligned:
        return x.reshape(out_shape)

    in_m, out_m, bcast = _merge_dims(in_aligned, out_shape)

    itemsize = max(1, jnp.dtype(x.dtype).itemsize)
    # Sublane packing multiple: f32 -> 8, bf16 -> 16, int8/fp8 -> 32.
    sub_mult = 8 * max(1, 4 // itemsize)

    if len(out_m) == 1:
        # Only reachable when every merged dim is broadcast -> input is a single
        # element.  Present the flat output as a lane-dense (rows, cols) slab.
        rows, cols = _factor_scalar(out_m[0], lane_cap)
        in_m, out_m, bcast = [1, 1], [rows, cols], [True, True]

    nd = len(out_m)

    # ---- Output block: greedily fold dims (last -> first) into a byte budget.
    budget = max(1, target_block_bytes // itemsize)      # elements per block
    out_block = [1] * nd

    lane = out_m[-1] if out_m[-1] <= lane_cap else lane_cap   # lane_cap % 128 == 0
    out_block[-1] = lane
    remaining = max(1, budget // max(lane, 1))

    if nd >= 2:
        want = min(out_m[-2], remaining)
        if want < out_m[-2]:
            w = (want // sub_mult) * sub_mult
            want = w if w >= sub_mult else min(out_m[-2], sub_mult)
        out_block[-2] = want
        remaining = max(1, remaining // max(want, 1))

    for d in range(nd - 3, -1, -1):
        take = max(1, min(out_m[d], remaining))
        out_block[d] = take
        remaining = max(1, remaining // take)

    in_block = [1 if bcast[d] else out_block[d] for d in range(nd)]
    grid = [_cdiv(out_m[d], out_block[d]) for d in range(nd)]

    # ---- Megacore: ensure >= 2 grid steps so both TensorCores get work (v7x).
    if math.prod(grid) == 1 and math.prod(out_m) >= 8192:
        split_order = ([nd - 2] if nd >= 2 else []) + [nd - 1] + list(range(max(0, nd - 2)))
        for d in split_order:
            mult = sub_mult if (nd >= 2 and d == nd - 2) else (128 if d == nd - 1 else 1)
            if out_m[d] >= 2 * mult:
                nb = _cdiv(_cdiv(out_m[d], 2), mult) * mult
                out_block[d] = nb
                in_block[d] = 1 if bcast[d] else nb
                grid[d] = _cdiv(out_m[d], nb)
                break

    # ---- Grid ordering: broadcast axes innermost (fastest) so the input block
    # index is unchanged across consecutive steps and its DMA is skipped.
    order = [d for d in range(nd) if not bcast[d]] + [d for d in range(nd) if bcast[d]]
    pos = {d: i for i, d in enumerate(order)}
    pgrid = tuple(int(grid[d]) for d in order)

    def in_index_map(*idx):
        return tuple(0 if bcast[d] else idx[pos[d]] for d in range(nd))

    def out_index_map(*idx):
        return tuple(idx[pos[d]] for d in range(nd))

    # ---- VMEM budget: 2x double-buffered (out + in) blocks plus headroom,
    # capped so it stays well inside v7x's 64 MiB physical VMEM.
    out_block_bytes = math.prod(out_block) * itemsize
    in_block_bytes = math.prod(in_block) * itemsize
    need = 2 * (out_block_bytes + in_block_bytes)
    vmem_limit = int(min(max(need + (8 << 20), 16 << 20), 40 << 20))

    out_bytes = math.prod(out_m) * itemsize
    in_bytes = math.prod(in_m) * itemsize

    x2 = x.reshape(in_m)

    out = pl.pallas_call(
        _expand_kernel,
        out_shape=jax.ShapeDtypeStruct(tuple(out_m), x.dtype),
        grid=pgrid,
        in_specs=[pl.BlockSpec(tuple(in_block), in_index_map)],
        out_specs=pl.BlockSpec(tuple(out_block), out_index_map),
        compiler_params=pltpu.CompilerParams(
            dimension_semantics=("parallel",) * nd,
            vmem_limit_bytes=vmem_limit),
        cost_estimate=pl.CostEstimate(
            flops=0, transcendentals=0, bytes_accessed=out_bytes + in_bytes),
    )(x2)

    return out.reshape(out_shape)


class Expand:
    """Pallas equivalent of the PyTorch Expand module."""

    def __init__(self, size):
        self.size = list(size)

    def __call__(self, in_tensor, **kwargs):
        return expand_pallas(in_tensor, self.size)


if __name__ == "__main__":
    key = jax.random.PRNGKey(0)
    k1, k2, k3, k4, k5, k6, k7 = jax.random.split(key, 7)

    # 1) Broadcast along a middle (channel) dim: (2,1,16,32) -> (2,4,16,32)
    x1 = jax.random.normal(k1, (2, 1, 16, 32), dtype=jnp.float32)
    o1 = jax.block_until_ready(Expand([2, 4, 16, 32])(x1))
    assert o1.shape == (2, 4, 16, 32) and o1.dtype == x1.dtype
    assert jnp.array_equal(o1, jnp.broadcast_to(x1, (2, 4, 16, 32)))

    # 2) Broadcast along a leading dim with -1 entries: (1,8,32) -> (4,8,32)
    x2 = jax.random.normal(k2, (1, 8, 32), dtype=jnp.float32)
    o2 = jax.block_until_ready(Expand([4, -1, -1])(x2))
    assert o2.shape == (4, 8, 32)
    assert jnp.array_equal(o2, jnp.broadcast_to(x2, (4, 8, 32)))

    # 3) Broadcast along the last (lane) dim: (2,16,1) -> (2,16,64)
    x3 = jax.random.normal(k3, (2, 16, 1), dtype=jnp.float32)
    o3 = jax.block_until_ready(Expand([2, 16, 64])(x3))
    assert o3.shape == (2, 16, 64)
    assert jnp.array_equal(o3, jnp.broadcast_to(x3, (2, 16, 64)))

    # 4) New leading dim: (16,128) -> (3,16,128)
    x4 = jax.random.normal(k4, (16, 128), dtype=jnp.float32)
    o4 = jax.block_until_ready(Expand([3, 16, 128])(x4))
    assert o4.shape == (3, 16, 128)
    assert jnp.array_equal(o4, jnp.broadcast_to(x4, (3, 16, 128)))

    # 5) Scalar-style expand (all dims broadcast): (1,1) -> (8,128), lane-dense path
    x5 = jax.random.normal(k5, (1, 1), dtype=jnp.float32)
    o5 = jax.block_until_ready(Expand([8, 128])(x5))
    assert o5.shape == (8, 128)
    assert jnp.array_equal(o5, jnp.broadcast_to(x5, (8, 128)))

    # 6) Multi-block grid with partial edge blocks + grid permutation:
    #    (1,48,160) -> (5,48,160), tiny block budget forces 4 lane blocks.
    x6 = jax.random.normal(k6, (1, 48, 160), dtype=jnp.float32)
    o6 = jax.block_until_ready(expand_pallas(x6, [5, 48, 160],
                                             target_block_bytes=32 * 1024))
    assert o6.shape == (5, 48, 160)
    assert jnp.array_equal(o6, jnp.broadcast_to(x6, (5, 48, 160)))

    # 7) Megacore-split path (single block would cover the whole output):
    #    (1,8,256) -> (6,8,256) with a small block budget.
    x7 = jax.random.normal(k7, (1, 8, 256), dtype=jnp.float32)
    o7 = jax.block_until_ready(expand_pallas(x7, [6, 8, 256],
                                             target_block_bytes=16 * 1024))
    assert o7.shape == (6, 8, 256)
    assert jnp.array_equal(o7, jnp.broadcast_to(x7, (6, 8, 256)))

    # 8) bf16 (packed sublane) sanity: (2,1,8,128) -> (2,4,8,128)
    x8 = jax.random.normal(k1, (2, 1, 8, 128)).astype(jnp.bfloat16)
    o8 = jax.block_until_ready(Expand([2, 4, 8, 128])(x8))
    assert o8.shape == (2, 4, 8, 128) and o8.dtype == jnp.bfloat16
    assert jnp.array_equal(o8, jnp.broadcast_to(x8, (2, 4, 8, 128)))

    print("KERNEL_OK")
</pallas_src>

<mosaic_0001>
module attributes {stable_mosaic.version = 11 : i64} {
  func.func @_expand_kernel(%arg0: i32, %arg1: i32, %arg2: i32, %arg3: memref<2x1x512xf32, #tpu.memory_space<vmem>>, %arg4: memref<2x4x512xf32, #tpu.memory_space<vmem>>) attributes {dimension_semantics = [#tpu.dimension_semantics<parallel>, #tpu.dimension_semantics<parallel>, #tpu.dimension_semantics<parallel>], iteration_bounds = array<i64: 1, 1, 1>, scalar_prefetch = 0 : i64, scratch_operands = 0 : i64, tpu.core_type = #tpu.core_type<tc>, window_params = [{transform_indices = @transform_0, window_bounds = array<i64: 2, 1, 512>}, {transform_indices = @transform_1, window_bounds = array<i64: 2, 4, 512>}]} {
    %c0 = arith.constant 0 : index
    %c0_0 = arith.constant 0 : index
    %c0_1 = arith.constant 0 : index
    %0 = vector.load %arg3[%c0, %c0_0, %c0_1] : memref<2x1x512xf32, #tpu.memory_space<vmem>>, vector<2x1x512xf32>
    %1 = vector.shape_cast %0 : vector<2x1x512xf32> to vector<2x1x512xf32>
    %2 = vector.broadcast %1 : vector<2x1x512xf32> to vector<2x4x512xf32>
    %c0_2 = arith.constant 0 : index
    %c0_3 = arith.constant 0 : index
    %c0_4 = arith.constant 0 : index
    %3 = vector.load %arg4[%c0_2, %c0_3, %c0_4] : memref<2x4x512xf32, #tpu.memory_space<vmem>>, vector<2x4x512xf32>
    tpu.vector_store %arg4[%c0_2, %c0_3, %c0_4], %2 {strides = array<i32>} : memref<2x4x512xf32, #tpu.memory_space<vmem>>, vector<2x4x512xf32>,
    return
  }
  func.func @transform_0(%arg0: i32, %arg1: i32, %arg2: i32) -> (i32, i32, i32) {
    %c0_i32 = arith.constant 0 : i32
    %c0_i32_0 = arith.constant 0 : i32
    return %arg0, %c0_i32, %arg1 : i32, i32, i32
  }
  func.func @transform_1(%arg0: i32, %arg1: i32, %arg2: i32) -> (i32, i32, i32) {
    %c0_i32 = arith.constant 0 : i32
    return %arg0, %arg2, %arg1 : i32, i32, i32
  }
}

</mosaic_0001>

<llo_original>
// kernel: tpu_custom_call.1
$region0: #{tpu_custom_call.1}
  #allocation0 [shape = 'u32[]', space=smem, size = 0x4, offset = 0x4, fixed_abs, tag = 'smem constant byte address 0x4 - core index']
  #allocation1 [shape = 'u32[72,128]{1,0:T(1,128)}', space=vmem, size = 0x9000, scoped, tag = 'internal scratch']
  %s0 = inlined_call_operand.hbm [shape: f32[2,1,512], index: 0, kind: input, shape index: {}]
  %s1 = inlined_call_operand.hbm [shape: f32[2,4,512], index: 1, kind: output, shape index: {}]
  %s2 = sld [smem:[#allocation0]]
  $region18: #{tpu_custom_call.1} parent=0
    _
  %s4 = ssub.s32 1, %s2
  %s5 = scalar_select 0, %s4, %s2
  $region1: #{tpu_custom_call.1} parent=0
    #allocation2 [shape = 'u8[4096]{0}', space=vmem, size = 0x1000, scoped, tag = 'input window, operand 0, single buffered']
    #allocation3 [shape = 's32[1]{0}', space=sflag, size = 0x4, scoped, tag = 'scoped memory for tpu_custom_call.1']
    #allocation4 [shape = 's32[1]{0}', space=sflag, size = 0x4, scoped, tag = 'scoped memory for tpu_custom_call.1']
    #allocation5 [shape = 'u8[16384]{0}', space=vmem, size = 0x4000, scoped, tag = 'output window, operand 0, single buffered']
    %6 = vsyncpa [#allocation3], 0
    %7 = vsyncpa [#allocation4], 0
    // Predicated region
    $region2: #{tpu_custom_call.1} parent=1 // pred_check
      _
    $region3: #{tpu_custom_call.1} parent=1 // pred_check_branch
      %9 = sbr.rel (0) target = $region5
    $region4: #{tpu_custom_call.1} parent=1 // pred_region
      %11 = vsyncadd [#allocation3], 0
      %s12 = sshll.u32 %s0, 4
      %s13 = int_to_ptr.hbm [resolvable:$true] %s12
      %s14 = sshll.u32 [#allocation2], 4
      %s15 = int_to_ptr.vmem [resolvable:$true] %s14
      %20 = dma.hbm_to_vmem [thread:$0]  %s13, 128, %s15, [#allocation3], 64, 64, 4
    $region5: #{tpu_custom_call.1} parent=1 // pred_fallthru
      _
    // Predicated region
    $region6: #{tpu_custom_call.1} parent=1 // pred_check
      _
    $region7: #{tpu_custom_call.1} parent=1 // pred_check_branch
      %22 = sbr.rel (0) target = $region9
    $region8: #{tpu_custom_call.1} parent=1 // pred_region
      %24 = dma.done [#allocation3], 128
    $region9: #{tpu_custom_call.1} parent=1 // pred_fallthru
      _
    %v25 = vld [vmem:[#allocation2] sm:$0xf]
    %v26 = vld [vmem:[#allocation2 + $0x4] sm:$0xf]
    %v29 = vperm.slane %v25, 0
    %v30 = vperm.slane %v25, 1
    %v31 = vperm.slane %v25, 2
    %v32 = vperm.slane %v25, 3
    %v33 = vperm.slane %v26, 0
    %v34 = vperm.slane %v26, 1
    %v35 = vperm.slane %v26, 2
    %v36 = vperm.slane %v26, 3
    %v37 = vrot.slane %v30, 4
    %v38 = vrot.slane %v32, 4
    %v39 = vrot.slane %v34, 4
    %v40 = vrot.slane %v36, 4
    %vm41 = vcmask 1043456
    %v42 = vsel %vm41, %v29, %v37
    %v43 = vsel %vm41, %v31, %v38
    %v44 = vsel %vm41, %v33, %v39
    %v45 = vsel %vm41, %v35, %v40
    %50 = vst [vmem:[#allocation5] sm:$0xff] %v42
    %51 = vst [vmem:[#allocation5 + $0x8] sm:$0xff] %v43
    %52 = vst [vmem:[#allocation5 + $0x10] sm:$0xff] %v44
    %53 = vst [vmem:[#allocation5 + $0x18] sm:$0xff] %v45
    // Predicated region
    $region10: #{tpu_custom_call.1} parent=1 // pred_check
      _
    $region11: #{tpu_custom_call.1} parent=1 // pred_check_branch
      %55 = sbr.rel (0) target = $region13
    $region12: #{tpu_custom_call.1} parent=1 // pred_region
      %57 = vsyncadd [#allocation4], 0
      %s58 = sshll.u32 [#allocation5], 4
      %s59 = int_to_ptr.vmem [resolvable:$true] %s58
      %s60 = sshll.u32 %s1, 4
      %s61 = int_to_ptr.hbm [resolvable:$true] %s60
      %66 = dma.vmem_to_hbm [thread:$0]  %s59, 512, %s61, [#allocation4], 256, 256, 16
    $region13: #{tpu_custom_call.1} parent=1 // pred_fallthru
      _
    // Predicated region
    $region14: #{tpu_custom_call.1} parent=1 // pred_check
      _
    $region15: #{tpu_custom_call.1} parent=1 // pred_check_branch
      %68 = sbr.rel (0) target = $region17
    $region16: #{tpu_custom_call.1} parent=1 // pred_region
      %70 = dma.done [#allocation4], 512
    $region17: #{tpu_custom_call.1} parent=1 // pred_fallthru
      _
    %71 = vsyncpa [#allocation3], 1
    %72 = vsyncpa [#allocation4], 1

</llo_original>
